<compile_context>
chip_gen: v6e
topology: v6e:2x2x1
jax: 0.10.0
libtpu: 0.0.40
codegen_flags: <defaults>
</compile_context>

<pallas_src>
import math

import jax
import jax.numpy as jnp
from jax.experimental import pallas as pl
from jax.experimental.pallas import tpu as pltpu


# ---------------------------------------------------------------------------
# Shared GRUCell gate math (f32 accumulation, f32 gate math).
# ---------------------------------------------------------------------------
def _gru_gates(inp, h_prev, w_ih, w_hh, bias):
    """One GRUCell.

    inp    : (TB, Ipad) compute dtype (bf16/f32)
    h_prev : (TB, H)    f32
    w_ih   : (Ipad, 3H) compute dtype, gate order [r|z|n]
    w_hh   : (H,   3H)  compute dtype
    bias   : (1, 4H)    f32, [b_ir+b_hr | b_iz+b_hz | b_in | b_hn]
    returns h_new (TB, H) f32
    """
    H = h_prev.shape[-1]
    gx = jnp.dot(inp, w_ih, preferred_element_type=jnp.float32)          # (TB,3H)
    gh = jnp.dot(h_prev.astype(w_hh.dtype), w_hh,
                 preferred_element_type=jnp.float32)                     # (TB,3H)
    g_rz = gx[:, :2 * H] + gh[:, :2 * H] + bias[:, :2 * H]
    r = jax.nn.sigmoid(g_rz[:, :H])
    z = jax.nn.sigmoid(g_rz[:, H:])
    n = jnp.tanh(gx[:, 2 * H:] + bias[:, 2 * H:3 * H]
                 + r * (gh[:, 2 * H:] + bias[:, 3 * H:]))
    return n + z * (h_prev - n)                                          # f32


# ---------------------------------------------------------------------------
# Kernel A: single decode step.  One grid point == (batch tile, layer).
# ---------------------------------------------------------------------------
def stacked_gru_step_kernel(x_ref, h_ref, wih_ref, whh_ref, b_ref,
                            out_ref, act_ref):
    """
    x_ref   : (TB, Ipad)                    layer-0 input (zero padded), f32
    h_ref   : (1, TB, H)                    previous hidden of this layer, f32
    wih_ref : (1|L, Ipad, 3H)               streamed (1) or resident (L) weights
    whh_ref : (1|L, H,   3H)
    b_ref   : (1|L, 1,   4H)                merged biases, f32
    out_ref : (1, TB, H)                    new hidden for this layer
    act_ref : (TB, Ipad)  VMEM scratch      inter-layer activation, compute dtype
    """
    layer = pl.program_id(1)
    H = out_ref.shape[-1]

    @pl.when(layer == 0)
    def _():
        act_ref[...] = x_ref[...].astype(act_ref.dtype)

    # Static branch: streamed weights have a leading block dim of 1,
    # resident weights carry all L layers and are sliced by layer id.
    li = 0 if wih_ref.shape[0] == 1 else layer
    w_ih = wih_ref[li]
    w_hh = whh_ref[li]
    bias = b_ref[li]
    h_prev = h_ref[0]

    h_new = _gru_gates(act_ref[...], h_prev, w_ih, w_hh, bias)
    out_ref[0] = h_new.astype(out_ref.dtype)

    # Carry to the next layer entirely in VMEM (compute dtype).  If Ipad > H
    # the stale tail columns hit zero-padded weight rows (contribute 0).
    if act_ref.shape[-1] == H:
        act_ref[...] = h_new.astype(act_ref.dtype)
    else:
        act_ref[:, :H] = h_new.astype(act_ref.dtype)


# ---------------------------------------------------------------------------
# Kernel B: sequence-fused.  One grid point == (batch tile, time step, layer).
# Weights are VMEM-resident; hidden state carried across time in scratch.
# ---------------------------------------------------------------------------
def stacked_gru_seq_kernel(x_ref, h_ref, wih_ref, whh_ref, b_ref,
                           out_seq_ref, out_hid_ref, act_ref, hstate_ref):
    """
    x_ref       : (1, TB, Ipad)   input at time t, f32
    h_ref       : (1, TB, H)      initial hidden of this layer, f32
    wih_ref     : (L, Ipad, 3H)   resident weights (fetched once)
    whh_ref     : (L, H,   3H)
    b_ref       : (L, 1,   4H)
    out_seq_ref : (1, TB, H)      last layer's output at time t
    out_hid_ref : (1, TB, H)      hidden state of this layer (final write wins)
    act_ref     : (TB, Ipad)      VMEM scratch, inter-layer carry (compute dtype)
    hstate_ref  : (L, TB, H)      VMEM scratch, per-layer hidden across time, f32
    """
    t = pl.program_id(1)
    layer = pl.program_id(2)
    num_layers = pl.num_programs(2)
    H = out_hid_ref.shape[-1]

    @pl.when(t == 0)
    def _():
        hstate_ref[layer] = h_ref[0]            # seed this layer's time carry

    @pl.when(layer == 0)
    def _():
        act_ref[...] = x_ref[0].astype(act_ref.dtype)

    h_prev = hstate_ref[layer]
    h_new = _gru_gates(act_ref[...], h_prev, wih_ref[layer], whh_ref[layer],
                       b_ref[layer])

    hstate_ref[layer] = h_new
    out_hid_ref[0] = h_new.astype(out_hid_ref.dtype)

    @pl.when(layer == num_layers - 1)
    def _():
        out_seq_ref[0] = h_new.astype(out_seq_ref.dtype)

    if act_ref.shape[-1] == H:
        act_ref[...] = h_new.astype(act_ref.dtype)
    else:
        act_ref[:, :H] = h_new.astype(act_ref.dtype)


# ---------------------------------------------------------------------------
# VMEM budgeting helpers.
# ---------------------------------------------------------------------------
def _physical_vmem_bytes():
    """Physical per-TensorCore VMEM; conservative fallback if the query fails."""
    try:
        info = pltpu.get_tpu_info()
        for attr in ("vmem_capacity_bytes", "vmem_size_bytes", "vmem_bytes"):
            v = getattr(info, attr, None)
            if v:
                return int(v)
    except Exception:
        pass
    return 64 << 20          # v7x per-TC (smallest of the recent generations)


def _vmem_limit(working_bytes):
    """Explicit scoped-VMEM limit: working set * 1.5 + headroom, clamped."""
    limit = int(1.5 * working_bytes) + (4 << 20)
    limit = max(limit, 16 << 20)
    return min(limit, _physical_vmem_bytes() - (2 << 20))


# ---------------------------------------------------------------------------
# One-time parameter preprocessing (hoisted out of the per-step hot path).
# ---------------------------------------------------------------------------
def prepare_params(params, input_size, rnn_size, compute_dtype=jnp.bfloat16):
    """Transpose PyTorch GRUCell params to matmul layout, pad layer-0 input dim,
    fold the r/z biases, merge all biases into one (1, 4H) array per layer,
    cast weights to `compute_dtype`, and stack over layers.

    params[i] = (w_ih (3H, In_i), w_hh (3H, H), b_ih (3H,), b_hh (3H,)),
    gate order along 3H is [reset; update; new] (PyTorch layout).
    Returns (w_ih_all (L,Ipad,3H), w_hh_all (L,H,3H), b_all (L,1,4H), Ipad).
    """
    H = rnn_size
    ipad = max(input_size, H)
    w_ih_l, w_hh_l, b_l = [], [], []
    for (w_ih, w_hh, b_ih, b_hh) in params:
        in_sz = w_ih.shape[1]
        wih_t = w_ih.T                                   # (In_i, 3H), cols [r|z|n]
        if in_sz < ipad:
            wih_t = jnp.pad(wih_t, ((0, ipad - in_sz), (0, 0)))
        whh_t = w_hh.T                                   # (H, 3H)
        b_ih3 = b_ih.reshape(3, H)
        b_hh3 = b_hh.reshape(3, H)
        bias = jnp.concatenate(
            [b_ih3[0] + b_hh3[0],      # r bias (folded)
             b_ih3[1] + b_hh3[1],      # z bias (folded)
             b_ih3[2],                 # n input bias
             b_hh3[2]]).reshape(1, 4 * H)   # b_hn (stays inside r*(...))
        w_ih_l.append(wih_t.astype(compute_dtype))
        w_hh_l.append(whh_t.astype(compute_dtype))
        b_l.append(bias.astype(jnp.float32))
    return (jnp.stack(w_ih_l), jnp.stack(w_hh_l), jnp.stack(b_l), ipad)


def init_stacked_gru_params(key, num_layers, input_size, rnn_size,
                            dtype=jnp.float32):
    """Deterministic PyTorch-style init: U(-1/sqrt(H), 1/sqrt(H))."""
    params = []
    k = 1.0 / math.sqrt(rnn_size)
    in_sz = input_size
    for _ in range(num_layers):
        key, k1, k2, k3, k4 = jax.random.split(key, 5)
        w_ih = jax.random.uniform(k1, (3 * rnn_size, in_sz), dtype, -k, k)
        w_hh = jax.random.uniform(k2, (3 * rnn_size, rnn_size), dtype, -k, k)
        b_ih = jax.random.uniform(k3, (3 * rnn_size,), dtype, -k, k)
        b_hh = jax.random.uniform(k4, (3 * rnn_size,), dtype, -k, k)
        params.append((w_ih, w_hh, b_ih, b_hh))
        in_sz = rnn_size
    return params


# ---------------------------------------------------------------------------
# Forward wrapper: single step (== the PyTorch module's forward).
# ---------------------------------------------------------------------------
def stacked_gru_forward(prepped, x, hidden, *, batch_tile=None,
                        weights_resident=None, vmem_limit_bytes=None):
    """StackedGRU.forward: returns (last-layer output, stacked new hidden)."""
    w_ih_all, w_hh_all, b_all, ipad = prepped
    num_layers, _, h3 = w_ih_all.shape
    H = h3 // 3
    B, in_sz = x.shape
    if in_sz < ipad:
        x = jnp.pad(x, ((0, 0), (0, ipad - in_sz)))

    # v5e/v6e: keep nb=1 (single TC).  v7x: pass batch_tile=B//2 (8-aligned).
    tb = B if batch_tile is None else batch_tile
    assert B % tb == 0, "batch must be divisible by batch_tile"
    nb = B // tb

    itemw = w_ih_all.dtype.itemsize
    per_layer_w = (ipad + H) * 3 * H * itemw + 4 * H * 4
    if weights_resident is None:
        # Make the whole stack VMEM-resident when it fits comfortably
        # (v6e: 128 MiB physical; on v7x this only triggers for modest H).
        weights_resident = num_layers * per_layer_w <= _physical_vmem_bytes() // 2

    if weights_resident:
        w_specs = [
            pl.BlockSpec((num_layers, ipad, 3 * H), lambda b, l: (0, 0, 0)),
            pl.BlockSpec((num_layers, H, 3 * H), lambda b, l: (0, 0, 0)),
            pl.BlockSpec((num_layers, 1, 4 * H), lambda b, l: (0, 0, 0)),
        ]
        w_working = num_layers * per_layer_w
    else:
        # Streamed per layer; BlockSpec double-buffers automatically.
        # (If profiling shows exposed weight DMA with few layers, raise to
        #  pipeline_mode=pl.Buffered(3) on v6e.)
        w_specs = [
            pl.BlockSpec((1, ipad, 3 * H), lambda b, l: (l, 0, 0)),
            pl.BlockSpec((1, H, 3 * H), lambda b, l: (l, 0, 0)),
            pl.BlockSpec((1, 1, 4 * H), lambda b, l: (l, 0, 0)),
        ]
        w_working = 2 * per_layer_w

    if vmem_limit_bytes is None:
        act_bytes = tb * ipad * itemw
        io_bytes = 2 * (tb * ipad * 4 + 2 * tb * H * 4)       # x, h_in, h_out (x2 buf)
        temp_bytes = 8 * tb * 3 * H * 4                        # gx/gh/gates f32
        vmem_limit_bytes = _vmem_limit(w_working + act_bytes + io_bytes + temp_bytes)

    h_new = pl.pallas_call(
        stacked_gru_step_kernel,
        out_shape=jax.ShapeDtypeStruct((num_layers, B, H), hidden.dtype),
        grid_spec=pltpu.PrefetchScalarGridSpec(
            num_scalar_prefetch=0,
            grid=(nb, num_layers),
            in_specs=[
                pl.BlockSpec((tb, ipad), lambda b, l: (b, 0)),           # x
                pl.BlockSpec((1, tb, H), lambda b, l: (l, b, 0)),        # hidden
            ] + w_specs,
            out_specs=pl.BlockSpec((1, tb, H), lambda b, l: (l, b, 0)),
            scratch_shapes=[pltpu.VMEM((tb, ipad), w_ih_all.dtype)],     # act carry
        ),
        compiler_params=pltpu.CompilerParams(
            # batch tiles independent (megacore on v7x); layers are a chain.
            dimension_semantics=("parallel", "arbitrary"),
            vmem_limit_bytes=vmem_limit_bytes,
        ),
    )(x, hidden, w_ih_all, w_hh_all, b_all)

    # Inter-layer dropout is the identity in eval mode; output == last layer's h.
    return h_new[-1], h_new


# ---------------------------------------------------------------------------
# Forward wrapper: sequence-fused (amortizes weight reads across time steps).
# ---------------------------------------------------------------------------
def stacked_gru_forward_seq(prepped, xs, hidden, *, batch_tile=None,
                            vmem_limit_bytes=None):
    """Apply the stacked GRU over a whole (T, B, In) sequence in one kernel.

    Returns (outputs (T, B, H) = last layer's h at every step,
             final hidden (L, B, H)).
    Weights are held VMEM-resident for the whole call; for very large L*H,
    fall back to the per-step stacked_gru_forward (or a layer-major ordering).
    """
    w_ih_all, w_hh_all, b_all, ipad = prepped
    num_layers, _, h3 = w_ih_all.shape
    H = h3 // 3
    T, B, in_sz = xs.shape
    if in_sz < ipad:
        xs = jnp.pad(xs, ((0, 0), (0, 0), (0, ipad - in_sz)))

    tb = B if batch_tile is None else batch_tile
    assert B % tb == 0
    nb = B // tb

    itemw = w_ih_all.dtype.itemsize
    per_layer_w = (ipad + H) * 3 * H * itemw + 4 * H * 4
    if vmem_limit_bytes is None:
        working = (num_layers * per_layer_w
                   + num_layers * tb * H * 4            # hstate scratch
                   + tb * ipad * itemw                  # act scratch
                   + 2 * (tb * ipad * 4 + 3 * tb * H * 4)
                   + 8 * tb * 3 * H * 4)
        vmem_limit_bytes = _vmem_limit(working)

    out_seq, out_hid = pl.pallas_call(
        stacked_gru_seq_kernel,
        out_shape=(jax.ShapeDtypeStruct((T, B, H), hidden.dtype),
                   jax.ShapeDtypeStruct((num_layers, B, H), hidden.dtype)),
        grid_spec=pltpu.PrefetchScalarGridSpec(
            num_scalar_prefetch=0,
            grid=(nb, T, num_layers),
            in_specs=[
                pl.BlockSpec((1, tb, ipad), lambda b, t, l: (t, b, 0)),       # xs
                pl.BlockSpec((1, tb, H), lambda b, t, l: (l, b, 0)),          # h0
                pl.BlockSpec((num_layers, ipad, 3 * H),
                             lambda b, t, l: (0, 0, 0)),                      # w_ih
                pl.BlockSpec((num_layers, H, 3 * H),
                             lambda b, t, l: (0, 0, 0)),                      # w_hh
                pl.BlockSpec((num_layers, 1, 4 * H),
                             lambda b, t, l: (0, 0, 0)),                      # bias
            ],
            out_specs=[
                pl.BlockSpec((1, tb, H), lambda b, t, l: (t, b, 0)),          # seq out
                pl.BlockSpec((1, tb, H), lambda b, t, l: (l, b, 0)),          # hidden
            ],
            scratch_shapes=[
                pltpu.VMEM((tb, ipad), w_ih_all.dtype),          # act carry (layers)
                pltpu.VMEM((num_layers, tb, H), jnp.float32),    # hidden carry (time)
            ],
        ),
        compiler_params=pltpu.CompilerParams(
            dimension_semantics=("parallel", "arbitrary", "arbitrary"),
            vmem_limit_bytes=vmem_limit_bytes,
        ),
    )(xs, hidden, w_ih_all, w_hh_all, b_all)

    return out_seq, out_hid


# ---------------------------------------------------------------------------
# Pure-JAX references (mirror the prepared params / precision strategy).
# ---------------------------------------------------------------------------
def stacked_gru_reference(prepped, x, hidden):
    w_ih_all, w_hh_all, b_all, ipad = prepped
    num_layers = w_ih_all.shape[0]
    H = hidden.shape[-1]
    B, in_sz = x.shape
    cdt = w_ih_all.dtype
    inp = jnp.pad(x, ((0, 0), (0, ipad - in_sz))) if in_sz < ipad else x
    inp = inp.astype(cdt)
    hs = []
    for l in range(num_layers):
        h_new = _gru_gates(inp, hidden[l], w_ih_all[l], w_hh_all[l], b_all[l])
        hs.append(h_new)
        nxt = h_new.astype(cdt)
        inp = nxt if ipad == H else jnp.pad(nxt, ((0, 0), (0, ipad - H)))
    return hs[-1], jnp.stack(hs)


def stacked_gru_reference_seq(prepped, xs, hidden):
    h = hidden
    outs = []
    for t in range(xs.shape[0]):
        o, h = stacked_gru_reference(prepped, xs[t], h)
        outs.append(o)
    return jnp.stack(outs), h


if __name__ == "__main__":
    num_layers = 2
    input_size = 16
    rnn_size = 32
    batch = 4
    seq_len = 6
    dropout = 0.1  # eval-mode: identity between layers

    key = jax.random.PRNGKey(0)
    key, kx, kxs, kh, kp = jax.random.split(key, 5)

    x = jax.random.normal(kx, (batch, input_size), jnp.float32)
    xs = jax.random.normal(kxs, (seq_len, batch, input_size), jnp.float32)
    hidden = jax.random.normal(kh, (num_layers, batch, rnn_size), jnp.float32)
    params = init_stacked_gru_params(kp, num_layers, input_size, rnn_size)

    # One-time preprocessing (transpose, pad, fold+merge biases, bf16 weights).
    prepped = prepare_params(params, input_size, rnn_size,
                             compute_dtype=jnp.bfloat16)

    # --- single decode step (the module's forward), both weight paths -------
    out_res, h_res = stacked_gru_forward(prepped, x, hidden,
                                         weights_resident=True)
    out_str, h_str = stacked_gru_forward(prepped, x, hidden,
                                         weights_resident=False)
    jax.block_until_ready(h_res)
    jax.block_until_ready(h_str)

    out_ref, h_ref = stacked_gru_reference(prepped, x, hidden)
    err_res = float(jnp.max(jnp.abs(h_res - h_ref)))
    err_str = float(jnp.max(jnp.abs(h_str - h_ref)))

    assert out_res.shape == (batch, rnn_size)
    assert h_res.shape == (num_layers, batch, rnn_size)
    assert err_res < 5e-3, f"resident-weights mismatch: {err_res}"
    assert err_str < 5e-3, f"streamed-weights mismatch: {err_str}"

    # --- sequence-fused variant (weights read once for the whole sequence) --
    seq_out, seq_h = stacked_gru_forward_seq(prepped, xs, hidden)
    jax.block_until_ready(seq_out)
    jax.block_until_ready(seq_h)

    seq_out_ref, seq_h_ref = stacked_gru_reference_seq(prepped, xs, hidden)
    err_seq = max(float(jnp.max(jnp.abs(seq_out - seq_out_ref))),
                  float(jnp.max(jnp.abs(seq_h - seq_h_ref))))

    assert seq_out.shape == (seq_len, batch, rnn_size)
    assert seq_h.shape == (num_layers, batch, rnn_size)
    assert err_seq < 2e-2, f"sequence kernel mismatch: {err_seq}"

    print("KERNEL_OK")
</pallas_src>

<mosaic_0001>
module attributes {stable_mosaic.version = 11 : i64} {
  func.func @stacked_gru_step_kernel(%arg0: i32, %arg1: i32, %arg2: memref<4x32xf32, #tpu.memory_space<vmem>>, %arg3: memref<1x4x32xf32, #tpu.memory_space<vmem>>, %arg4: memref<2x32x96xbf16, #tpu.memory_space<vmem>>, %arg5: memref<2x32x96xbf16, #tpu.memory_space<vmem>>, %arg6: memref<2x1x128xf32, #tpu.memory_space<vmem>>, %arg7: memref<1x4x32xf32, #tpu.memory_space<vmem>>, %arg8: memref<4x32xbf16, #tpu.memory_space<vmem>>) attributes {dimension_semantics = [#tpu.dimension_semantics<parallel>, #tpu.dimension_semantics<arbitrary>], iteration_bounds = array<i64: 1, 2>, scalar_prefetch = 0 : i64, scratch_operands = 1 : i64, tpu.core_type = #tpu.core_type<tc>, window_params = [{transform_indices = @transform_0, window_bounds = array<i64: 4, 32>}, {transform_indices = @transform_1, window_bounds = array<i64: 1, 4, 32>}, {pipeline_mode = #tpu.pipeline_mode<synchronous>, transform_indices = @transform_2, window_bounds = array<i64: 2, 32, 96>}, {pipeline_mode = #tpu.pipeline_mode<synchronous>, transform_indices = @transform_3, window_bounds = array<i64: 2, 32, 96>}, {pipeline_mode = #tpu.pipeline_mode<synchronous>, transform_indices = @transform_4, window_bounds = array<i64: 2, 1, 128>}, {transform_indices = @transform_5, window_bounds = array<i64: 1, 4, 32>}]} {
    %c0_i32 = arith.constant 0 : i32
    %0 = arith.cmpi eq, %arg1, %c0_i32 : i32
    %1 = arith.extui %0 : i1 to i32
    %c0_i32_0 = arith.constant 0 : i32
    %2 = arith.cmpi ne, %1, %c0_i32_0 : i32
    scf.if %2 {
      %c0_19 = arith.constant 0 : index
      %c0_20 = arith.constant 0 : index
      %55 = vector.load %arg2[%c0_19, %c0_20] : memref<4x32xf32, #tpu.memory_space<vmem>>, vector<4x32xf32>
      %56 = arith.truncf %55 : vector<4x32xf32> to vector<4x32xbf16>
      %c0_21 = arith.constant 0 : index
      %c0_22 = arith.constant 0 : index
      %57 = vector.load %arg8[%c0_21, %c0_22] : memref<4x32xbf16, #tpu.memory_space<vmem>>, vector<4x32xbf16>
      tpu.vector_store %arg8[%c0_21, %c0_22], %56 {strides = array<i32>} : memref<4x32xbf16, #tpu.memory_space<vmem>>, vector<4x32xbf16>,
    } else {
    }
    %3 = arith.index_cast %arg1 : i32 to index
    %c0 = arith.constant 0 : index
    %c0_1 = arith.constant 0 : index
    %4 = vector.load %arg4[%3, %c0, %c0_1] : memref<2x32x96xbf16, #tpu.memory_space<vmem>>, vector<1x32x96xbf16>
    %5 = vector.shape_cast %4 : vector<1x32x96xbf16> to vector<32x96xbf16>
    %6 = arith.index_cast %arg1 : i32 to index
    %c0_2 = arith.constant 0 : index
    %c0_3 = arith.constant 0 : index
    %7 = vector.load %arg5[%6, %c0_2, %c0_3] : memref<2x32x96xbf16, #tpu.memory_space<vmem>>, vector<1x32x96xbf16>
    %8 = vector.shape_cast %7 : vector<1x32x96xbf16> to vector<32x96xbf16>
    %9 = arith.index_cast %arg1 : i32 to index
    %c0_4 = arith.constant 0 : index
    %c0_5 = arith.constant 0 : index
    %10 = vector.load %arg6[%9, %c0_4, %c0_5] : memref<2x1x128xf32, #tpu.memory_space<vmem>>, vector<1x1x128xf32>
    %11 = vector.shape_cast %10 : vector<1x1x128xf32> to vector<1x128xf32>
    %c0_6 = arith.constant 0 : index
    %c0_7 = arith.constant 0 : index
    %c0_8 = arith.constant 0 : index
    %12 = vector.load %arg3[%c0_6, %c0_7, %c0_8] : memref<1x4x32xf32, #tpu.memory_space<vmem>>, vector<1x4x32xf32>
    %13 = vector.shape_cast %12 : vector<1x4x32xf32> to vector<4x32xf32>
    %c0_9 = arith.constant 0 : index
    %c0_10 = arith.constant 0 : index
    %14 = vector.load %arg8[%c0_9, %c0_10] : memref<4x32xbf16, #tpu.memory_space<vmem>>, vector<4x32xbf16>
    %cst = arith.constant dense<0.000000e+00> : vector<4x96xf32>
    %15 = tpu.matmul %14, %5, %cst {dimension_numbers = #tpu.dot_dimension_numbers<[1], [0], [0], [1], [0, 0, 1, 1], [], []>} : vector<4x32xbf16>, vector<32x96xbf16>, vector<4x96xf32> -> vector<4x96xf32>
    %16 = arith.truncf %13 : vector<4x32xf32> to vector<4x32xbf16>
    %cst_11 = arith.constant dense<0.000000e+00> : vector<4x96xf32>
    %17 = tpu.matmul %16, %8, %cst_11 {dimension_numbers = #tpu.dot_dimension_numbers<[1], [0], [0], [1], [0, 0, 1, 1], [], []>} : vector<4x32xbf16>, vector<32x96xbf16>, vector<4x96xf32> -> vector<4x96xf32>
    %18 = vector.extract_strided_slice %15 {offsets = [0, 0], sizes = [4, 64], strides = [1, 1]} : vector<4x96xf32> to vector<4x64xf32>
    %19 = vector.extract_strided_slice %17 {offsets = [0, 0], sizes = [4, 64], strides = [1, 1]} : vector<4x96xf32> to vector<4x64xf32>
    %20 = arith.addf %18, %19 : vector<4x64xf32>
    %21 = vector.extract_strided_slice %11 {offsets = [0, 0], sizes = [1, 64], strides = [1, 1]} : vector<1x128xf32> to vector<1x64xf32>
    %22 = vector.broadcast %21 : vector<1x64xf32> to vector<4x64xf32>
    %23 = arith.addf %20, %22 : vector<4x64xf32>
    %24 = vector.extract_strided_slice %23 {offsets = [0, 0], sizes = [4, 32], strides = [1, 1]} : vector<4x64xf32> to vector<4x32xf32>
    %25 = arith.negf %24 : vector<4x32xf32>
    %26 = math.exp %25 : vector<4x32xf32>
    %cst_12 = arith.constant 1.000000e+00 : f32
    %27 = vector.broadcast %cst_12 : f32 to vector<4x32xf32>
    %28 = arith.addf %27, %26 : vector<4x32xf32>
    %29 = arith.divf %27, %28 : vector<4x32xf32>
    %30 = vector.extract_strided_slice %23 {offsets = [0, 32], sizes = [4, 32], strides = [1, 1]} : vector<4x64xf32> to vector<4x32xf32>
    %31 = arith.negf %30 : vector<4x32xf32>
    %32 = math.exp %31 : vector<4x32xf32>
    %cst_13 = arith.constant 1.000000e+00 : f32
    %33 = vector.broadcast %cst_13 : f32 to vector<4x32xf32>
    %34 = arith.addf %33, %32 : vector<4x32xf32>
    %35 = arith.divf %33, %34 : vector<4x32xf32>
    %36 = vector.extract_strided_slice %15 {offsets = [0, 64], sizes = [4, 32], strides = [1, 1]} : vector<4x96xf32> to vector<4x32xf32>
    %37 = vector.extract_strided_slice %11 {offsets = [0, 64], sizes = [1, 32], strides = [1, 1]} : vector<1x128xf32> to vector<1x32xf32>
    %38 = vector.broadcast %37 : vector<1x32xf32> to vector<4x32xf32>
    %39 = arith.addf %36, %38 : vector<4x32xf32>
    %40 = vector.extract_strided_slice %17 {offsets = [0, 64], sizes = [4, 32], strides = [1, 1]} : vector<4x96xf32> to vector<4x32xf32>
    %41 = vector.extract_strided_slice %11 {offsets = [0, 96], sizes = [1, 32], strides = [1, 1]} : vector<1x128xf32> to vector<1x32xf32>
    %42 = vector.broadcast %41 : vector<1x32xf32> to vector<4x32xf32>
    %43 = arith.addf %40, %42 : vector<4x32xf32>
    %44 = arith.mulf %29, %43 : vector<4x32xf32>
    %45 = arith.addf %39, %44 : vector<4x32xf32>
    %46 = math.tanh %45 : vector<4x32xf32>
    %47 = arith.subf %13, %46 : vector<4x32xf32>
    %48 = arith.mulf %35, %47 : vector<4x32xf32>
    %49 = arith.addf %46, %48 : vector<4x32xf32>
    %c0_14 = arith.constant 0 : index
    %c0_15 = arith.constant 0 : index
    %c0_16 = arith.constant 0 : index
    %50 = vector.load %arg7[%c0_14, %c0_15, %c0_16] : memref<1x4x32xf32, #tpu.memory_space<vmem>>, vector<1x4x32xf32>
    %51 = vector.shape_cast %50 : vector<1x4x32xf32> to vector<4x32xf32>
    %52 = vector.shape_cast %49 : vector<4x32xf32> to vector<1x4x32xf32>
    tpu.vector_store %arg7[%c0_14, %c0_15, %c0_16], %52 {strides = array<i32>} : memref<1x4x32xf32, #tpu.memory_space<vmem>>, vector<1x4x32xf32>,
    %53 = arith.truncf %49 : vector<4x32xf32> to vector<4x32xbf16>
    %c0_17 = arith.constant 0 : index
    %c0_18 = arith.constant 0 : index
    %54 = vector.load %arg8[%c0_17, %c0_18] : memref<4x32xbf16, #tpu.memory_space<vmem>>, vector<4x32xbf16>
    tpu.vector_store %arg8[%c0_17, %c0_18], %53 {strides = array<i32>} : memref<4x32xbf16, #tpu.memory_space<vmem>>, vector<4x32xbf16>,
    return
  }
  func.func @transform_0(%arg0: i32, %arg1: i32) -> (i32, i32) {
    %c0_i32 = arith.constant 0 : i32
    %c0_i32_0 = arith.constant 0 : i32
    return %arg0, %c0_i32 : i32, i32
  }
  func.func @transform_1(%arg0: i32, %arg1: i32) -> (i32, i32, i32) {
    %c0_i32 = arith.constant 0 : i32
    %c0_i32_0 = arith.constant 0 : i32
    return %arg1, %arg0, %c0_i32 : i32, i32, i32
  }
  func.func @transform_2(%arg0: i32, %arg1: i32) -> (i32, i32, i32) {
    %c0_i32 = arith.constant 0 : i32
    %c0_i32_0 = arith.constant 0 : i32
    %c0_i32_1 = arith.constant 0 : i32
    %c0_i32_2 = arith.constant 0 : i32
    return %c0_i32, %c0_i32_0, %c0_i32_1 : i32, i32, i32
  }
  func.func @transform_3(%arg0: i32, %arg1: i32) -> (i32, i32, i32) {
    %c0_i32 = arith.constant 0 : i32
    %c0_i32_0 = arith.constant 0 : i32
    %c0_i32_1 = arith.constant 0 : i32
    %c0_i32_2 = arith.constant 0 : i32
    return %c0_i32, %c0_i32_0, %c0_i32_1 : i32, i32, i32
  }
  func.func @transform_4(%arg0: i32, %arg1: i32) -> (i32, i32, i32) {
    %c0_i32 = arith.constant 0 : i32
    %c0_i32_0 = arith.constant 0 : i32
    %c0_i32_1 = arith.constant 0 : i32
    %c0_i32_2 = arith.constant 0 : i32
    return %c0_i32, %c0_i32_0, %c0_i32_1 : i32, i32, i32
  }
  func.func @transform_5(%arg0: i32, %arg1: i32) -> (i32, i32, i32) {
    %c0_i32 = arith.constant 0 : i32
    %c0_i32_0 = arith.constant 0 : i32
    return %arg1, %arg0, %c0_i32 : i32, i32, i32
  }
}

</mosaic_0001>

<llo_original>
// kernel: tpu_custom_call.1
$region0: #{tpu_custom_call.1}
  #allocation0 [shape = 'u32[]', space=smem, size = 0x4, offset = 0x4, fixed_abs, tag = 'smem constant byte address 0x4 - core index']
  #allocation1 [shape = 'u32[144,128]{1,0:T(1,128)}', space=vmem, size = 0x12000, scoped, tag = 'internal scratch']
  #allocation2 [shape = 'bf16[4,32]{1,0:T(4,128)(2,1)}', space=vmem, size = 0x400, scoped, tag = 'scratch operand']
  %s0 = inlined_call_operand.hbm [shape: f32[4,32], index: 0, kind: input, shape index: {}]
  %s1 = inlined_call_operand.hbm [shape: f32[2,4,32], index: 1, kind: input, shape index: {}]
  %s2 = inlined_call_operand.hbm [shape: bf16[2,32,96], index: 2, kind: input, shape index: {}]
  %s3 = inlined_call_operand.hbm [shape: bf16[2,32,96], index: 3, kind: input, shape index: {}]
  %s4 = inlined_call_operand.vmem [shape: f32[2,1,128], index: 4, kind: input, shape index: {}]
  %s5 = inlined_call_operand.hbm [shape: f32[2,4,32], index: 5, kind: output, shape index: {}]
  %s6 = sld [smem:[#allocation0]]
  $region73: #{tpu_custom_call.1} parent=0
    _
  %s8 = ssub.s32 1, %s6
  %s9 = scalar_select 0, %s8, %s6
  $region1: #{tpu_custom_call.1} parent=0
    #allocation3 [shape = 'u8[2048]{0}', space=vmem, size = 0x800, scoped, tag = 'input window, operand 0, single buffered']
    #allocation4 [shape = 's32[2]{0}', space=sflag, size = 0x8, scoped, tag = 'scoped memory for tpu_custom_call.1']
    #allocation5 [shape = 's32[2]{0}', space=sflag, size = 0x8, scoped, tag = 'scoped memory for tpu_custom_call.1']
    #allocation6 [shape = 'u8[4096]{0}', space=vmem, size = 0x1000, scoped, tag = 'input window, operand 1']
    #allocation7 [shape = 's32[2]{0}', space=sflag, size = 0x8, scoped, tag = 'scoped memory for tpu_custom_call.1']
    #allocation8 [shape = 'u8[16384]{0}', space=vmem, size = 0x4000, scoped, tag = 'input window, operand 2, single buffered']
    #allocation9 [shape = 'u8[16384]{0}', space=vmem, size = 0x4000, scoped, tag = 'input window, operand 3, single buffered']
    #allocation10 [shape = 's32[1]{0}', space=sflag, size = 0x4, scoped, tag = 'scoped memory for tpu_custom_call.1']
    #allocation11 [shape = 'u8[4096]{0}', space=vmem, size = 0x1000, scoped, tag = 'output window, operand 0']
    %10 = vsyncpa [#allocation4], 0
    %11 = vsyncpa [#allocation7], 0
    %s12 = scalar_lea.sflag [#allocation7], 1
    %13 = vsyncpa %s12, 0
    %14 = vsyncpa [#allocation10], 0
    %15 = vsyncpa [#allocation5], 0
    %s16 = scalar_lea.sflag [#allocation5], 1
    %17 = vsyncpa %s16, 0
    loop: start=0, step=1, limit=4
    $region2: #{tpu_custom_call.1} parent=1 // loop_pre_header
      _
    $region3: #{tpu_custom_call.1} parent=1 // loop_header
      %s19 = sphi 0, %s23
      %p20 = scmp.ge.s32.totalorder %s19, 4
      %s26 = sphi 0, %s38
      %s27 = sphi 0, %s34
      %s28 = sphi 0, %s26
      %s29 = sphi 0, %s27
      %s30 = sphi 0, %s28
      %s31 = sphi 0, %s29
      %s41 = sphi 0, %s43
      %s44 = sphi 0, %s41
      %s45 = sphi 0, %s44
      %s61 = sphi 0, %s45
      %s69 = sphi 0, %s71
      %s72 = sphi 0, %s69
      %s73 = sphi 0, %s72
      %s89 = sphi 0, %s73
      %s93 = sphi 0, %s93
      %s95 = sphi 0, %s93
      %s96 = sphi 0, %s95
      %s110 = sphi 0, %s96
      %s114 = sphi 0, %s114
      %s116 = sphi 0, %s114
      %s117 = sphi 0, %s116
      %s131 = sphi 0, %s117
      %s135 = sphi 0, %s135
      %s137 = sphi 0, %s135
      %s138 = sphi 0, %s137
      %s152 = sphi 0, %s138
      %s160 = sphi 0, %s162
      %s163 = sphi 0, %s160
      %s164 = sphi 0, %s163
      %s180 = sphi 0, %s164
    $region4: #{tpu_custom_call.1} parent=1 // loop_header_branch
      %22 = sbr.rel (%p20) target = $region8
    $region5: #{tpu_custom_call.1} parent=1 // loop_body
      %s24 = ssub.s32 %s19, 1
      %s25 = ssub.s32 %s19, 2
      %s32 = sadd.s32 1, %s27
      %p33 = scmp.ge.s32.totalorder %s32, 2
      %s34 = scalar_select %p33, 0, %s32
      %s35 = sadd.s32 1, %s26
      %s36 = scalar_select %p33, %s35, %s26
      %p37 = scmp.ge.s32.totalorder %s36, 1
      %s38 = scalar_select %p37, 0, %s36
      %s39 = ssub.s32 %s26, %s38
      %p40 = scmp.eq.s32.totalorder %s39, 0
      %s42 = sadd.s32 %s41, 1
      %s43 = scalar_select %p40, %s41, %s42
      %p46 = pneg %p40
      %p47 = scmp.eq.s32.totalorder %s19, 1
      %p48 = por %p46, %p47
      %p49 = scmp.ne.s32.totalorder %s41, %s44
      %p50 = scmp.eq.s32.totalorder %s19, 0
      %p51 = por %p49, %p50
      %p52 = scmp.ne.s32.totalorder %s41, %s44
      %p53 = scmp.eq.s32.totalorder %s24, 1
      %p54 = por %p52, %p53
      %p55 = scmp.ne.s32.totalorder %s44, %s45
      %p56 = scmp.eq.s32.totalorder %s24, 0
      %p57 = por %p55, %p56
      %p58 = scmp.ne.s32.totalorder %s44, %s45
      %p59 = scmp.eq.s32.totalorder %s25, 1
      %p60 = por %p58, %p59
      %p62 = scmp.ne.s32.totalorder %s45, %s61
      %p63 = scmp.eq.s32.totalorder %s25, 0
      %p64 = por %p62, %p63
      %s65 = ssub.s32 %s27, %s34
      %s66 = ssub.s32 %s26, %s38
      %s67 = sor.u32 %s65, %s66
      %p68 = scmp.eq.s32.totalorder %s67, 0
      %s70 = sadd.s32 %s69, 1
      %s71 = scalar_select %p68, %s69, %s70
      %p74 = pneg %p68
      %p75 = scmp.eq.s32.totalorder %s19, 1
      %p76 = por %p74, %p75
      %p77 = scmp.ne.s32.totalorder %s69, %s72
      %p78 = scmp.eq.s32.totalorder %s19, 0
      %p79 = por %p77, %p78
      %p80 = scmp.ne.s32.totalorder %s69, %s72
      %p81 = scmp.eq.s32.totalorder %s24, 1
      %p82 = por %p80, %p81
      %p83 = scmp.ne.s32.totalorder %s72, %s73
      %p84 = scmp.eq.s32.totalorder %s24, 0
      %p85 = por %p83, %p84
      %p86 = scmp.ne.s32.totalorder %s72, %s73
      %p87 = scmp.eq.s32.totalorder %s25, 1
      %p88 = por %p86, %p87
      %p90 = scmp.ne.s32.totalorder %s73, %s89
      %p91 = scmp.eq.s32.totalorder %s25, 0
      %p92 = por %p90, %p91
      %s94 = sadd.s32 %s93, 1
      %p97 = scmp.eq.s32.totalorder %s19, 1
      %p98 = scmp.ne.s32.totalorder %s93, %s95
      %p99 = scmp.eq.s32.totalorder %s19, 0
      %p100 = por %p98, %p99
      %p101 = scmp.ne.s32.totalorder %s93, %s95
      %p102 = scmp.eq.s32.totalorder %s24, 1
      %p103 = por %p101, %p102
      %p104 = scmp.ne.s32.totalorder %s95, %s96
      %p105 = scmp.eq.s32.totalorder %s24, 0
      %p106 = por %p104, %p105
      %p107 = scmp.ne.s32.totalorder %s95, %s96
      %p108 = scmp.eq.s32.totalorder %s25, 1
      %p109 = por %p107, %p108
      %p111 = scmp.ne.s32.totalorder %s96, %s110
      %p112 = scmp.eq.s32.totalorder %s25, 0
      %p113 = por %p111, %p112
      %s115 = sadd.s32 %s114, 1
      %p118 = scmp.eq.s32.totalorder %s19, 1
      %p119 = scmp.ne.s32.totalorder %s114, %s116
      %p120 = scmp.eq.s32.totalorder %s19, 0
      %p121 = por %p119, %p120
      %p122 = scmp.ne.s32.totalorder %s114, %s116
      %p123 = scmp.eq.s32.totalorder %s24, 1
      %p124 = por %p122, %p123
      %p125 = scmp.ne.s32.totalorder %s116, %s117
      %p126 = scmp.eq.s32.totalorder %s24, 0
      %p127 = por %p125, %p126
      %p128 = scmp.ne.s32.totalorder %s116, %s117
      %p129 = scmp.eq.s32.totalorder %s25, 1
      %p130 = por %p128, %p129
      %p132 = scmp.ne.s32.totalorder %s117, %s131
      %p133 = scmp.eq.s32.totalorder %s25, 0
      %p134 = por %p132, %p133
      %s136 = sadd.s32 %s135, 1
      %p139 = scmp.eq.s32.totalorder %s19, 1
      %p140 = scmp.ne.s32.totalorder %s135, %s137
      %p141 = scmp.eq.s32.totalorder %s19, 0
      %p142 = por %p140, %p141
      %p143 = scmp.ne.s32.totalorder %s135, %s137
      %p144 = scmp.eq.s32.totalorder %s24, 1
      %p145 = por %p143, %p144
      %p146 = scmp.ne.s32.totalorder %s137, %s138
      %p147 = scmp.eq.s32.totalorder %s24, 0
      %p148 = por %p146, %p147
      %p149 = scmp.ne.s32.totalorder %s137, %s138
      %p150 = scmp.eq.s32.totalorder %s25, 1
      %p151 = por %p149, %p150
      %p153 = scmp.ne.s32.totalorder %s138, %s152
      %p154 = scmp.eq.s32.totalorder %s25, 0
      %p155 = por %p153, %p154
      %s156 = ssub.s32 %s27, %s34
      %s157 = ssub.s32 %s26, %s38
      %s158 = sor.u32 %s156, %s157
      %p159 = scmp.eq.s32.totalorder %s158, 0
      %s161 = sadd.s32 %s160, 1
      %s162 = scalar_select %p159, %s160, %s161
      %p165 = pneg %p159
      %p166 = scmp.eq.s32.totalorder %s19, 1
      %p167 = por %p165, %p166
      %p168 = scmp.ne.s32.totalorder %s160, %s163
      %p169 = scmp.eq.s32.totalorder %s19, 0
      %p170 = por %p168, %p169
      %p171 = scmp.ne.s32.totalorder %s160, %s163
      %p172 = scmp.eq.s32.totalorder %s24, 1
      %p173 = por %p171, %p172
      %p174 = scmp.ne.s32.totalorder %s163, %s164
      %p175 = scmp.eq.s32.totalorder %s24, 0
      %p176 = por %p174, %p175
      %p177 = scmp.ne.s32.totalorder %s163, %s164
      %p178 = scmp.eq.s32.totalorder %s25, 1
      %p179 = por %p177, %p178
      %p181 = scmp.ne.s32.totalorder %s164, %s180
      %p182 = scmp.eq.s32.totalorder %s25, 0
      %p183 = por %p181, %p182
      %p184 = scmp.le.s32.totalorder 1, %s19
      %p185 = scmp.lt.s32.totalorder %s19, 3
      %p186 = pnand %p184, %p185
      %p187 = pneg %p186
      // Predicated region
      $region9: #{tpu_custom_call.1} parent=5 // pred_check
        _
      $region10: #{tpu_custom_call.1} parent=5 // pred_check_branch
        %189 = sbr.rel (%p186) target = $region12
      $region11: #{tpu_custom_call.1} parent=5 // pred_region
        %s190 = ssub.s32 %s19, 1
        // Predicated region
        $region13: #{tpu_custom_call.1} parent=11 // pred_check
          %p191 = pneg %p57
        $region14: #{tpu_custom_call.1} parent=11 // pred_check_branch
          %193 = sbr.rel (%p191) target = $region16
        $region15: #{tpu_custom_call.1} parent=11 // pred_region
          %s195 = ssub.s32 64, 64
          %196 = vsyncadd [#allocation4], %s195
          %s197 = smul.addr %s28, 64
          %s198 = scalar_lea.hbm %s0, %s197
          %s200 = sshll.u32 [#allocation3], 4
          %s201 = int_to_ptr.vmem [resolvable:$true] %s200
          %203 = dma.hbm_to_vmem [thread:$0]  %s198, 64, %s201, [#allocation4]
        $region16: #{tpu_custom_call.1} parent=11 // pred_fallthru
          _
        // Predicated region
        $region17: #{tpu_custom_call.1} parent=11 // pred_check
          %p204 = pneg %p106
        $region18: #{tpu_custom_call.1} parent=11 // pred_check_branch
          %206 = sbr.rel (%p204) target = $region20
        $region19: #{tpu_custom_call.1} parent=11 // pred_region
          %s208 = ssub.s32 512, 512
          %209 = vsyncadd [#allocation7], %s208
          %s210 = sshll.u32 [#allocation8], 4
          %s211 = int_to_ptr.vmem [resolvable:$true] %s210
          %216 = dma.hbm_to_vmem [thread:$0]  %s2, 512, %s211, [#allocation7], 64, 64, 4
        $region20: #{tpu_custom_call.1} parent=11 // pred_fallthru
          _
        // Predicated region
        $region21: #{tpu_custom_call.1} parent=11 // pred_check
          %p217 = pneg %p127
        $region22: #{tpu_custom_call.1} parent=11 // pred_check_branch
          %219 = sbr.rel (%p217) target = $region24
        $region23: #{tpu_custom_call.1} parent=11 // pred_region
          %s221 = ssub.s32 512, 512
          %222 = vsyncadd [#allocation10], %s221
          %s223 = sshll.u32 [#allocation9], 4
          %s224 = int_to_ptr.vmem [resolvable:$true] %s223
          %229 = dma.hbm_to_vmem [thread:$0]  %s3, 512, %s224, [#allocation10], 64, 64, 4
        $region24: #{tpu_custom_call.1} parent=11 // pred_fallthru
          _
        // Predicated region
        $region25: #{tpu_custom_call.1} parent=11 // pred_check
          %p230 = pneg %p148
        $region26: #{tpu_custom_call.1} parent=11 // pred_check_branch
          %232 = sbr.rel (%p230) target = $region28
        $region27: #{tpu_custom_call.1} parent=11 // pred_region
          _
        $region28: #{tpu_custom_call.1} parent=11 // pred_fallthru
          _
      $region12: #{tpu_custom_call.1} parent=5 // pred_fallthru
        _
      %p233 = scmp.lt.s32.totalorder %s19, 2
      // Predicated region
      $region29: #{tpu_custom_call.1} parent=5 // pred_check
        %p234 = pneg %p233
      $region30: #{tpu_custom_call.1} parent=5 // pred_check_branch
        %236 = sbr.rel (%p234) target = $region32
      $region31: #{tpu_custom_call.1} parent=5 // pred_region
        // Predicated region
        $region33: #{tpu_custom_call.1} parent=31 // pred_check
          %p237 = pneg %p79
        $region34: #{tpu_custom_call.1} parent=31 // pred_check_branch
          %239 = sbr.rel (%p237) target = $region36
        $region35: #{tpu_custom_call.1} parent=31 // pred_region
          %s240 = sand.u32 %s19, 1
          %s241 = scalar_lea.sflag [#allocation7], %s240
          %s242 = sand.u32 %s69, 1
          %s243 = smul.addr %s242, 4
          %s244 = scalar_lea.vmem [#allocation6], %s243
          %s246 = ssub.s32 64, 64
          %247 = vsyncadd %s241, %s246
          %s248 = sadd.s32 %s26, %s27
          %s249 = smul.addr %s248, 64
          %s250 = scalar_lea.hbm %s1, %s249
          %s252 = sshll.u32 %s244, 4
          %s253 = int_to_ptr.vmem [resolvable:$true] %s252
          %255 = dma.hbm_to_vmem [thread:$0]  %s250, 64, %s253, %s241
        $region36: #{tpu_custom_call.1} parent=31 // pred_fallthru
          _
      $region32: #{tpu_custom_call.1} parent=5 // pred_fallthru
        _
      %p256 = scmp.le.s32.totalorder 1, %s19
      %p257 = scmp.lt.s32.totalorder %s19, 3
      %p258 = pnand %p256, %p257
      %p259 = pneg %p258
      // Predicated region
      $region37: #{tpu_custom_call.1} parent=5 // pred_check
        _
      $region38: #{tpu_custom_call.1} parent=5 // pred_check_branch
        %261 = sbr.rel (%p258) target = $region40
      $region39: #{tpu_custom_call.1} parent=5 // pred_region
        %s262 = ssub.s32 %s19, 1
        // Predicated region
        $region41: #{tpu_custom_call.1} parent=39 // pred_check
          %p263 = pneg %p57
        $region42: #{tpu_custom_call.1} parent=39 // pred_check_branch
          %265 = sbr.rel (%p263) target = $region44
        $region43: #{tpu_custom_call.1} parent=39 // pred_region
          %266 = dma.done [#allocation4], 64
        $region44: #{tpu_custom_call.1} parent=39 // pred_fallthru
          _
        %s267 = sand.u32 %s24, 1
        %s268 = scalar_lea.sflag [#allocation7], %s267
        %s269 = sand.u32 %s72, 1
        %s270 = smul.addr %s269, 4
        %s271 = scalar_lea.vmem [#allocation6], %s270
        // Predicated region
        $region45: #{tpu_custom_call.1} parent=39 // pred_check
          %p272 = pneg %p85
        $region46: #{tpu_custom_call.1} parent=39 // pred_check_branch
          %274 = sbr.rel (%p272) target = $region48
        $region47: #{tpu_custom_call.1} parent=39 // pred_region
          %275 = dma.done %s268, 64
        $region48: #{tpu_custom_call.1} parent=39 // pred_fallthru
          _
        // Predicated region
        $region49: #{tpu_custom_call.1} parent=39 // pred_check
          %p276 = pneg %p106
        $region50: #{tpu_custom_call.1} parent=39 // pred_check_branch
          %278 = sbr.rel (%p276) target = $region52
        $region51: #{tpu_custom_call.1} parent=39 // pred_region
          %279 = dma.done [#allocation7], 512
        $region52: #{tpu_custom_call.1} parent=39 // pred_fallthru
          _
        // Predicated region
        $region53: #{tpu_custom_call.1} parent=39 // pred_check
          %p280 = pneg %p127
        $region54: #{tpu_custom_call.1} parent=39 // pred_check_branch
          %282 = sbr.rel (%p280) target = $region56
        $region55: #{tpu_custom_call.1} parent=39 // pred_region
          %283 = dma.done [#allocation10], 512
        $region56: #{tpu_custom_call.1} parent=39 // pred_fallthru
          _
        %p284 = pneg %p57
        %p285 = pneg %p54
        %s286 = sand.u32 %s24, 1
        %s287 = scalar_lea.sflag [#allocation7], %s286
        %s288 = sand.u32 %s72, 1
        %s289 = smul.addr %s288, 4
        %s290 = scalar_lea.vmem [#allocation6], %s289
        %p291 = pneg %p85
        %p292 = pneg %p82
        %p293 = pneg %p106
        %p294 = pneg %p103
        %p295 = pneg %p127
        %p296 = pneg %p124
        %p297 = pneg %p148
        %p298 = pneg %p145
        %p299 = pneg %p176
        %p300 = pneg %p173
        %s301 = sand.u32 %s163, 1
        %s302 = scalar_lea.sflag [#allocation5], %s301
        %s303 = sand.u32 %s163, 1
        %s304 = smul.addr %s303, 4
        %s305 = scalar_lea.vmem [#allocation11], %s304
        %p307 = scmp.eq.s32.totalorder %s29, 0
        // Predicated region
        $region57: #{tpu_custom_call.1} parent=39 // pred_check
          %p308 = pneg %p307
        $region58: #{tpu_custom_call.1} parent=39 // pred_check_branch
          %310 = sbr.rel (%p308) target = $region60
        $region59: #{tpu_custom_call.1} parent=39 // pred_region
          %v311 = vld [vmem:[#allocation3] sm:$0xf]
          %v312 = vpack.c.bf16 %v311, %v311
          %vm313 = vcmask 254976
          %314 = vst.msk [vmem:[#allocation2] sm:$0x3] %vm313, %v312
        $region60: #{tpu_custom_call.1} parent=39 // pred_fallthru
          _
        %s315 = smul.u32 %s29, 4
        %s316 = smul.addr %s315, 4
        %s317 = scalar_lea.vmem [#allocation8], %s316
        %v318 = vld [vmem:[%s317] sm:$0xf]
        %v319 = vld [vmem:[%s317 + $0x4] sm:$0xf]
        %v320 = vld [vmem:[%s317 + $0x8] sm:$0xf]
        %v321 = vld [vmem:[%s317 + $0xc] sm:$0xf]
        %s322 = smul.addr %s315, 4
        %s323 = scalar_lea.vmem [#allocation9], %s322
        %v324 = vld [vmem:[%s323] sm:$0xf]
        %v325 = vld [vmem:[%s323 + $0x4] sm:$0xf]
        %v326 = vld [vmem:[%s323 + $0x8] sm:$0xf]
        %v327 = vld [vmem:[%s323 + $0xc] sm:$0xf]
        %s328 = scalar_lea.vmem %s4, %s29
        %v329 = vld [vmem:[%s328] sm:$0x1]
        %v330 = vld [vmem:[%s271] sm:$0xf]
        %v331 = vld [vmem:[#allocation2] sm:$0x3]
        %v336 = vunpack.c.l.b16 %v318
        %v337 = vunpack.c.l.b16 %v319
        %v338 = vunpack.c.l.b16 %v320
        %v339 = vunpack.c.l.b16 %v321
        %v340 = vpack.c.b16 %v337, %v336
        %v341 = vpack.c.b16 %v339, %v338
        %vm344 = vcmask 261120
        %v346 = vsel %vm344, %v331, 0
        %348 = vmatprep.subr.bf16.mxu0 0
        %349 = vmatpush1.bf16.msra.mxu0 0
        %350 = vmatprep.subr.bf16.mxu0 0
        %351 = vmatpush1.bf16.msra.mxu0 0
        %352 = vmatprep.subr.bf16.mxu0 0
        %353 = vmatpush1.bf16.msra.mxu0 0
        %354 = vmatprep.subr.bf16.mxu0 0
        %355 = vmatpush1.bf16.msra.mxu0 0
        %356 = vmatprep.subr.bf16.mxu0 0
        %357 = vmatpush1.bf16.msra.mxu0 0
        %358 = vmatprep.subr.bf16.mxu0 0
        %359 = vmatpush1.bf16.msra.mxu0 0
        %360 = vmatprep.subr.bf16.mxu0 0
        %361 = vmatpush1.bf16.msra.mxu0 %v341
        %362 = vmatprep.subr.bf16.mxu0 0
        %363 = vmatpush1.bf16.msra.mxu0 %v340
        %364 = vmatprep.subr.bf16.mxu0 0
        %365 = vmatpush2.bf16.msra.mxu0 0
        %366 = vmatprep.subr.bf16.mxu0 0
        %367 = vmatpush2.bf16.msra.mxu0 0
        %368 = vmatprep.subr.bf16.mxu0 0
        %369 = vmatpush2.bf16.msra.mxu0 0
        %370 = vmatprep.subr.bf16.mxu0 0
        %371 = vmatpush2.bf16.msra.mxu0 0
        %372 = vmatprep.subr.bf16.mxu0 0
        %373 = vmatpush2.bf16.msra.mxu0 0
        %374 = vmatprep.subr.bf16.mxu0 0
        %375 = vmatpush2.bf16.msra.mxu0 0
        %376 = vmatprep.subr.bf16.mxu0 0
        %377 = vmatpush2.bf16.msra.mxu0 0
        %378 = vmatprep.subr.bf16.mxu0 0
        %379 = vmatpush2.bf16.msra.mxu0 0
        %380 = vmatprep.mubr.bf16.mxu0 0
        %381 = vmatmul.mubr.bf16.gmra.mxu0 %v346
        %v382 = vpop.f32.mrf.mxu0
        %v383 = vadd.f32 0.0, %v382
        %v384 = vpop.f32.mrf.mxu0
        %v385 = vpop.f32.mrf.mxu0
        %v386 = vpop.f32.mrf.mxu0
        %387 = vdwg.mxu0
        %v388 = vpack.c.bf16 %v330, %v330
        %v393 = vunpack.c.l.b16 %v324
        %v394 = vunpack.c.l.b16 %v325
        %v395 = vunpack.c.l.b16 %v326
        %v396 = vunpack.c.l.b16 %v327
        %v397 = vpack.c.b16 %v394, %v393
        %v398 = vpack.c.b16 %v396, %v395
        %v402 = vsel %vm344, %v388, 0
        %404 = vmatprep.subr.bf16.mxu0 0
        %405 = vmatpush1.bf16.msra.mxu0 0
        %406 = vmatprep.subr.bf16.mxu0 0
        %407 = vmatpush1.bf16.msra.mxu0 0
        %408 = vmatprep.subr.bf16.mxu0 0
        %409 = vmatpush1.bf16.msra.mxu0 0
        %410 = vmatprep.subr.bf16.mxu0 0
        %411 = vmatpush1.bf16.msra.mxu0 0
        %412 = vmatprep.subr.bf16.mxu0 0
        %413 = vmatpush1.bf16.msra.mxu0 0
        %414 = vmatprep.subr.bf16.mxu0 0
        %415 = vmatpush1.bf16.msra.mxu0 0
        %416 = vmatprep.subr.bf16.mxu0 0
        %417 = vmatpush1.bf16.msra.mxu0 %v398
        %418 = vmatprep.subr.bf16.mxu0 0
        %419 = vmatpush1.bf16.msra.mxu0 %v397
        %420 = vmatprep.subr.bf16.mxu0 0
        %421 = vmatpush2.bf16.msra.mxu0 0
        %422 = vmatprep.subr.bf16.mxu0 0
        %423 = vmatpush2.bf16.msra.mxu0 0
        %424 = vmatprep.subr.bf16.mxu0 0
        %425 = vmatpush2.bf16.msra.mxu0 0
        %426 = vmatprep.subr.bf16.mxu0 0
        %427 = vmatpush2.bf16.msra.mxu0 0
        %428 = vmatprep.subr.bf16.mxu0 0
        %429 = vmatpush2.bf16.msra.mxu0 0
        %430 = vmatprep.subr.bf16.mxu0 0
        %431 = vmatpush2.bf16.msra.mxu0 0
        %432 = vmatprep.subr.bf16.mxu0 0
        %433 = vmatpush2.bf16.msra.mxu0 0
        %434 = vmatprep.subr.bf16.mxu0 0
        %435 = vmatpush2.bf16.msra.mxu0 0
        %436 = vmatprep.mubr.bf16.mxu0 0
        %437 = vmatmul.mubr.bf16.gmra.mxu0 %v402
        %v438 = vpop.f32.mrf.mxu0
        %v439 = vadd.f32 0.0, %v438
        %v440 = vpop.f32.mrf.mxu0
        %v441 = vpop.f32.mrf.mxu0
        %v442 = vpop.f32.mrf.mxu0
        %443 = vdwg.mxu0
        %v444 = vadd.f32 %v383, %v439
        %v446 = vlaneseq
        %v447 = vshrl.u32 %v446, 7
        %v448 = vsub.s32 0, %v447
        %v449 = vrot.slane %v329, %v448
        %v451 = vadd.f32 %v444, %v449
        %v452 = vxor.u32 %v451, 2147483648
        %v453 = vmul.f32 %v452, 1.442695
        %v454 = vpow.pop %v453
        %v455 = vadd.f32 %v454, 1.0
        %v456 = vrcp.pop %v455
        %v457 = vmul.f32 1.0, %v456
        %v458 = vadd.f32 %v383, %v449
        %459 = vrot.lane.b32.xlu0 %v449, 96
        %v460 = vpop.permute.xlu0 %459
        %v462 = vadd.f32 %v439, %v460
        %464 = vrot.lane.b32.xlu0 %v462, 64
        %v465 = vpop.permute.xlu0 %464
        %v467 = vmul.f32 %v457, %v465
        %469 = vrot.lane.b32.xlu0 %v467, 64
        %v470 = vpop.permute.xlu0 %469
        %v472 = vadd.f32 %v458, %v470
        %v473 = vtanh.pop %v472
        %475 = vrot.lane.b32.xlu0 %v473, 64
        %v476 = vpop.permute.xlu0 %475
        %v478 = vsub.f32 %v330, %v476
        %480 = vrot.lane.b32.xlu0 %v478, 32
        %v481 = vpop.permute.xlu0 %480
        %v483 = vmul.f32 %v457, %v481
        %485 = vrot.lane.b32.xlu0 %v483, 32
        %v486 = vpop.permute.xlu0 %485
        %v488 = vadd.f32 %v473, %v486
        %490 = vrot.lane.b32.xlu0 %v488, 64
        %v491 = vpop.permute.xlu0 %490
        %vm493 = vcmask 257024
        %494 = vst.msk [vmem:[%s305] sm:$0xf] %vm493, %v491
        %v495 = vpack.c.bf16 %v488, %v488
        %v498 = vunpack.c.l.s4 1983009808
        %v499 = vunpack.c.0.s8 %v498
        %v500 = vlaneseq
        %v501 = vshrl.u32 %v500, 7
        %v502 = vsub.s32 %v499, %v501
        %v503 = vrot.slane %v495, %v502
        %504 = vrot.lane.b32.xlu0 %v503, 64
        %v505 = vpop.permute.xlu0 %504
        %vm507 = vcmask 254976
        %508 = vst.msk [vmem:[#allocation2] sm:$0x3] %vm507, %v505
        %s509 = sand.u32 %s163, 1
        %s510 = scalar_lea.sflag [#allocation5], %s509
        %s511 = sand.u32 %s163, 1
        %s512 = smul.addr %s511, 4
        %s513 = scalar_lea.vmem [#allocation11], %s512
        // Predicated region
        $region61: #{tpu_custom_call.1} parent=39 // pred_check
          %p514 = pneg %p173
        $region62: #{tpu_custom_call.1} parent=39 // pred_check_branch
          %516 = sbr.rel (%p514) target = $region64
        $region63: #{tpu_custom_call.1} parent=39 // pred_region
          %s518 = ssub.s32 64, 64
          %519 = vsyncadd %s510, %s518
          %s520 = sadd.s32 %s28, %s29
          %s521 = smul.addr %s520, 64
          %s522 = scalar_lea.hbm %s5, %s521
          %s524 = sshll.u32 %s513, 4
          %s525 = int_to_ptr.vmem [resolvable:$true] %s524
          %527 = dma.vmem_to_hbm [thread:$0]  %s525, 64, %s522, %s510
        $region64: #{tpu_custom_call.1} parent=39 // pred_fallthru
          _
      $region40: #{tpu_custom_call.1} parent=5 // pred_fallthru
        _
      %p528 = scmp.le.s32.totalorder 2, %s19
      // Predicated region
      $region65: #{tpu_custom_call.1} parent=5 // pred_check
        %p529 = pneg %p528
      $region66: #{tpu_custom_call.1} parent=5 // pred_check_branch
        %531 = sbr.rel (%p529) target = $region68
      $region67: #{tpu_custom_call.1} parent=5 // pred_region
        %s532 = ssub.s32 %s19, 2
        // Predicated region
        $region69: #{tpu_custom_call.1} parent=67 // pred_check
          %p533 = pneg %p179
        $region70: #{tpu_custom_call.1} parent=67 // pred_check_branch
          %535 = sbr.rel (%p533) target = $region72
        $region71: #{tpu_custom_call.1} parent=67 // pred_region
          %s536 = sand.u32 %s164, 1
          %s537 = scalar_lea.sflag [#allocation5], %s536
          %s538 = sand.u32 %s164, 1
          %s539 = smul.addr %s538, 4
          %s540 = scalar_lea.vmem [#allocation11], %s539
          %541 = dma.done %s537, 64
        $region72: #{tpu_custom_call.1} parent=67 // pred_fallthru
          _
      $region68: #{tpu_custom_call.1} parent=5 // pred_fallthru
        _
    $region6: #{tpu_custom_call.1} parent=1 // loop_footer
      %s23 = sadd.s32 1, %s19
    $region7: #{tpu_custom_call.1} parent=1 // loop_footer_branch
      %18 = sbr.rel target = $region3
    $region8: #{tpu_custom_call.1} parent=1 // loop_exit
      _
    %542 = vsyncpa [#allocation4], 1
    %s543 = scalar_lea.sflag [#allocation4], 1
    %544 = vsyncpa %s543, 1
    %545 = vsyncpa [#allocation7], 1
    %s546 = scalar_lea.sflag [#allocation7], 1
    %547 = vsyncpa %s546, 1
    %548 = vsyncpa [#allocation10], 1
    %549 = vsyncpa [#allocation5], 1
    %s550 = scalar_lea.sflag [#allocation5], 1
    %551 = vsyncpa %s550, 1

</llo_original>
